<compile_context>
chip_gen: v7x
topology: tpu7x:2x2x1
jax: 0.10.0
libtpu: 0.0.40
codegen_flags: <defaults>
</compile_context>

<pallas_src>
import functools

import jax
import jax.numpy as jnp
from jax.experimental import pallas as pl
from jax.experimental.pallas import tpu as pltpu


def _upsample2x_kernel(rw_ref, x_ref, o_ref, *, split, two_w):
    # rw_ref: (W, 2W) 0/1 bf16 width-interleave selection matrix (grid-invariant,
    #         same block index every step -> DMA'd once).
    # x_ref : (TR, W)   input row tile (rows = flattened (n, c, h)).
    # o_ref : (TR, 4W)  output row tile; the flat output row is
    #         [width-doubled row | width-doubled row]  (the two identical image rows).
    rw = rw_ref[...]
    if split:
        # Exact f32 / f16 path without Precision.HIGHEST: x == hi + mid + lo with
        # every term exactly representable in bf16, so three DEFAULT-precision
        # (single-pass) MXU selections followed by f32 adds reproduce x exactly
        # (selection rows are one-hot; partial sums never exceed 24 mantissa bits).
        xf = x_ref[...].astype(jnp.float32)
        hi = xf.astype(jnp.bfloat16)
        r1 = xf - hi.astype(jnp.float32)
        mid = r1.astype(jnp.bfloat16)
        r2 = r1 - mid.astype(jnp.float32)
        lo = r2.astype(jnp.bfloat16)
        u = (jnp.dot(hi, rw, preferred_element_type=jnp.float32)
             + jnp.dot(mid, rw, preferred_element_type=jnp.float32)
             + jnp.dot(lo, rw, preferred_element_type=jnp.float32))
    else:
        # bf16: operands are already in the MXU's native format -> one pass, exact.
        u = jnp.dot(x_ref[...], rw, preferred_element_type=jnp.float32)
    u = u.astype(o_ref.dtype)
    # Height x2: two contiguous stores (extra vst is free in the store slot;
    # no extra matmul width).
    o_ref[:, :two_w] = u
    o_ref[:, two_w:] = u


def _pick_row_tile(R, W, itemsize, split):
    """Rows per block: large enough to amortize the ~0.35 us per-step overhead,
    small enough that in+out double buffers AND the f32 intermediates fit the
    explicit 32 MiB VMEM limit, with >= 4 (preferably even) grid steps so both
    v7x TensorCores get >= 2 iterations each."""
    lane = 128

    def pad(n):
        return pl.cdiv(n, lane) * lane

    in_row = pad(W) * itemsize                       # lane-padded input row
    out_row = pad(4 * W) * itemsize                  # lane-padded output row
    # f32 dot result (2W wide) + split temporaries (3x bf16 + 2x f32 residuals).
    interm_row = pad(2 * W) * 4 + (pad(W) * (3 * 2 + 2 * 4) if split else 0)
    per_row = 2 * (in_row + out_row) + interm_row    # double-buffered I/O + live temps
    budget = 12 << 20                                # ~12 MiB target, < 32 MiB limit

    sub = 8 if itemsize >= 4 else 16                 # sublane packing: f32 vs bf16/f16
    tr = max(sub, (budget // per_row) // sub * sub)  # VMEM cap

    max_steps = pl.cdiv(R, sub)                      # can't go below one sublane group
    steps = max(pl.cdiv(R, tr), min(4, max_steps))   # >= 4 steps when rows allow
    if steps % 2 == 1 and steps < max_steps:         # even step count for 2 v7x TCs
        steps += 1
    tr = max(sub, pl.cdiv(pl.cdiv(R, steps), sub) * sub)
    return int(min(tr, R))


def upsample_nearest_2x(x):
    """Pallas TPU equivalent of F.interpolate(x, scale_factor=2, mode='nearest')."""
    if not jnp.issubdtype(x.dtype, jnp.floating):
        # TODO(synk): integer dtypes need a copy-based (non-MXU) interleave path.
        raise NotImplementedError("upsample_nearest_2x supports float dtypes only")

    N, C, H, W = x.shape
    R = N * C * H
    itemsize = jnp.dtype(x.dtype).itemsize

    # Free, contiguity-preserving view: rows are (n, c, h).
    x_flat = x.reshape(R, W)

    # bf16 is the MXU's native operand format -> single exact DEFAULT pass.
    # f32 / f16 take the exact three-term bf16 split inside the kernel.
    split = x.dtype != jnp.bfloat16

    # Width-interleave selection matrix RW2[j, q] = 1 iff q // 2 == j, shape (W, 2W).
    # 0/1 values are exact in bf16.
    q = jnp.arange(2 * W, dtype=jnp.int32)
    j = jnp.arange(W, dtype=jnp.int32)
    rw = ((q[None, :] // 2) == j[:, None]).astype(jnp.bfloat16)

    tr = _pick_row_tile(R, W, itemsize, split)
    grid_r = pl.cdiv(R, tr)
    passes = 3 if split else 1

    out_flat = pl.pallas_call(
        functools.partial(_upsample2x_kernel, split=split, two_w=2 * W),
        out_shape=jax.ShapeDtypeStruct((R, 4 * W), x.dtype),
        grid_spec=pltpu.PrefetchScalarGridSpec(
            num_scalar_prefetch=0,
            grid=(grid_r,),
            in_specs=[
                # Grid-invariant selection matrix: block index never changes,
                # so Pallas DMAs it exactly once.
                pl.BlockSpec((W, 2 * W), lambda i: (0, 0)),
                # Input row tile.
                pl.BlockSpec((tr, W), lambda i: (i, 0)),
            ],
            out_specs=pl.BlockSpec((tr, 4 * W), lambda i: (i, 0)),
        ),
        compiler_params=pltpu.CompilerParams(
            dimension_semantics=("parallel",),
            vmem_limit_bytes=32 * 1024 * 1024,
        ),
        cost_estimate=pl.CostEstimate(
            flops=2 * R * (2 * W) * (passes * W),     # scaled by MXU pass count
            transcendentals=0,
            bytes_accessed=(R * W + R * 4 * W) * itemsize + W * (2 * W) * 2,
        ),
    )(rw, x_flat)

    # Free reshape: (R, 4W) row-major == (N, C, 2H, 2W) row-major.
    return out_flat.reshape(N, C, 2 * H, 2 * W)


if __name__ == "__main__":
    key = jax.random.PRNGKey(0)
    # Small NCHW input consistent with the module's forward (any 4-D tensor).
    x = jax.random.normal(key, (2, 4, 16, 16), dtype=jnp.float32)

    out = jax.block_until_ready(upsample_nearest_2x(x))

    # Plain-JAX reference for nearest-neighbor 2x upsampling.
    ref = jnp.repeat(jnp.repeat(x, 2, axis=2), 2, axis=3)

    assert out.shape == (2, 4, 32, 32), out.shape
    assert bool(jnp.allclose(out, ref, rtol=1e-6, atol=1e-8)), \
        "kernel output does not match nearest-neighbor reference"
    print("KERNEL_OK")
</pallas_src>

<mosaic_0001>
module attributes {stable_mosaic.version = 11 : i64} {
  func.func @_upsample2x_kernel(%arg0: i32, %arg1: memref<16x32xbf16, #tpu.memory_space<vmem>>, %arg2: memref<32x16xf32, #tpu.memory_space<vmem>>, %arg3: memref<32x64xf32, #tpu.memory_space<vmem>>) attributes {dimension_semantics = [#tpu.dimension_semantics<parallel>], iteration_bounds = array<i64: 4>, scalar_prefetch = 0 : i64, scratch_operands = 0 : i64, tpu.core_type = #tpu.core_type<tc>, window_params = [{pipeline_mode = #tpu.pipeline_mode<synchronous>, transform_indices = @transform_0, window_bounds = array<i64: 16, 32>}, {transform_indices = @transform_1, window_bounds = array<i64: 32, 16>}, {transform_indices = @transform_2, window_bounds = array<i64: 32, 64>}]} {
    %c0 = arith.constant 0 : index
    %c0_0 = arith.constant 0 : index
    %0 = vector.load %arg1[%c0, %c0_0] : memref<16x32xbf16, #tpu.memory_space<vmem>>, vector<16x32xbf16>
    %c0_1 = arith.constant 0 : index
    %c0_2 = arith.constant 0 : index
    %1 = vector.load %arg2[%c0_1, %c0_2] : memref<32x16xf32, #tpu.memory_space<vmem>>, vector<32x16xf32>
    %2 = arith.truncf %1 : vector<32x16xf32> to vector<32x16xbf16>
    %3 = arith.extf %2 : vector<32x16xbf16> to vector<32x16xf32>
    %4 = arith.subf %1, %3 : vector<32x16xf32>
    %5 = arith.truncf %4 : vector<32x16xf32> to vector<32x16xbf16>
    %6 = arith.extf %5 : vector<32x16xbf16> to vector<32x16xf32>
    %7 = arith.subf %4, %6 : vector<32x16xf32>
    %8 = arith.truncf %7 : vector<32x16xf32> to vector<32x16xbf16>
    %cst = arith.constant dense<0.000000e+00> : vector<32x32xf32>
    %9 = tpu.matmul %2, %0, %cst {dimension_numbers = #tpu.dot_dimension_numbers<[1], [0], [0], [1], [0, 0, 1, 1], [], []>} : vector<32x16xbf16>, vector<16x32xbf16>, vector<32x32xf32> -> vector<32x32xf32>
    %cst_3 = arith.constant dense<0.000000e+00> : vector<32x32xf32>
    %10 = tpu.matmul %5, %0, %cst_3 {dimension_numbers = #tpu.dot_dimension_numbers<[1], [0], [0], [1], [0, 0, 1, 1], [], []>} : vector<32x16xbf16>, vector<16x32xbf16>, vector<32x32xf32> -> vector<32x32xf32>
    %11 = arith.addf %9, %10 : vector<32x32xf32>
    %cst_4 = arith.constant dense<0.000000e+00> : vector<32x32xf32>
    %12 = tpu.matmul %8, %0, %cst_4 {dimension_numbers = #tpu.dot_dimension_numbers<[1], [0], [0], [1], [0, 0, 1, 1], [], []>} : vector<32x16xbf16>, vector<16x32xbf16>, vector<32x32xf32> -> vector<32x32xf32>
    %13 = arith.addf %11, %12 : vector<32x32xf32>
    %c0_5 = arith.constant 0 : index
    %c0_6 = arith.constant 0 : index
    %14 = vector.load %arg3[%c0_5, %c0_6] : memref<32x64xf32, #tpu.memory_space<vmem>>, vector<32x32xf32>
    tpu.vector_store %arg3[%c0_5, %c0_6], %13 {strides = array<i32>} : memref<32x64xf32, #tpu.memory_space<vmem>>, vector<32x32xf32>,
    %c0_7 = arith.constant 0 : index
    %c32 = arith.constant 32 : index
    %15 = vector.load %arg3[%c0_7, %c32] : memref<32x64xf32, #tpu.memory_space<vmem>>, vector<32x32xf32>
    tpu.vector_store %arg3[%c0_7, %c32], %13 {strides = array<i32>} : memref<32x64xf32, #tpu.memory_space<vmem>>, vector<32x32xf32>,
    return
  }
  func.func @transform_0(%arg0: i32) -> (i32, i32) {
    %c0_i32 = arith.constant 0 : i32
    %c0_i32_0 = arith.constant 0 : i32
    %c0_i32_1 = arith.constant 0 : i32
    return %c0_i32, %c0_i32_0 : i32, i32
  }
  func.func @transform_1(%arg0: i32) -> (i32, i32) {
    %c0_i32 = arith.constant 0 : i32
    %c0_i32_0 = arith.constant 0 : i32
    return %arg0, %c0_i32 : i32, i32
  }
  func.func @transform_2(%arg0: i32) -> (i32, i32) {
    %c0_i32 = arith.constant 0 : i32
    %c0_i32_0 = arith.constant 0 : i32
    return %arg0, %c0_i32 : i32, i32
  }
}

</mosaic_0001>

<llo_original>
// kernel: tpu_custom_call.1
$region0: #{tpu_custom_call.1}
  #allocation0 [shape = 'u32[]', space=smem, size = 0x4, offset = 0x4, fixed_abs, tag = 'smem constant byte address 0x4 - core index']
  #allocation1 [shape = 'u32[144,128]{1,0:T(1,128)}', space=vmem, size = 0x12000, scoped, tag = 'internal scratch']
  %s0 = inlined_call_operand.vmem [shape: bf16[16,32], index: 0, kind: input, shape index: {}]
  %s1 = inlined_call_operand.vmem [shape: f32[128,16], index: 1, kind: input, shape index: {}]
  %s2 = inlined_call_operand.vmem [shape: f32[128,64], index: 2, kind: output, shape index: {}]
  %s3 = sld [smem:[#allocation0]]
  $region41: #{tpu_custom_call.1} parent=0
    _
  %s5 = ssub.s32 1, %s3
  %s6 = scalar_select 0, %s5, %s3
  loop: start=0, step=1, limit=6
  $region2: #{tpu_custom_call.1} parent=0 // loop_pre_header
    _
  $region3: #{tpu_custom_call.1} parent=0 // loop_header
    %s8 = sphi 0, %s12
    %p9 = scmp.ge.s32.totalorder %s8, 6
    %s16 = sphi 0, %s16
    %s18 = sphi 0, %s16
    %s19 = sphi 0, %s18
    %s33 = sphi 0, %s19
    %s39 = sphi 0, %s41
    %s42 = sphi 0, %s39
    %s43 = sphi 0, %s42
    %s59 = sphi 0, %s43
    %s65 = sphi 0, %s67
    %s68 = sphi 0, %s65
    %s69 = sphi 0, %s68
    %s85 = sphi 0, %s69
  $region4: #{tpu_custom_call.1} parent=0 // loop_header_branch
    %11 = sbr.rel (%p9) target = $region8
  $region5: #{tpu_custom_call.1} parent=0 // loop_body
    %s13 = ssub.s32 %s8, 1
    %s14 = ssub.s32 %s8, 2
    %s15 = sadd.s32 %s8, 1
    %s17 = sadd.s32 %s16, 1
    %p20 = scmp.eq.s32.totalorder %s8, 3
    %p21 = scmp.ne.s32.totalorder %s16, %s18
    %p22 = scmp.eq.s32.totalorder %s8, 0
    %p23 = por %p21, %p22
    %p24 = scmp.ne.s32.totalorder %s16, %s18
    %p25 = scmp.eq.s32.totalorder %s13, 3
    %p26 = por %p24, %p25
    %p27 = scmp.ne.s32.totalorder %s18, %s19
    %p28 = scmp.eq.s32.totalorder %s13, 0
    %p29 = por %p27, %p28
    %p30 = scmp.ne.s32.totalorder %s18, %s19
    %p31 = scmp.eq.s32.totalorder %s14, 3
    %p32 = por %p30, %p31
    %p34 = scmp.ne.s32.totalorder %s19, %s33
    %p35 = scmp.eq.s32.totalorder %s14, 0
    %p36 = por %p34, %p35
    %s37 = ssub.s32 %s8, %s15
    %p38 = scmp.eq.s32.totalorder %s37, 0
    %s40 = sadd.s32 %s39, 1
    %s41 = scalar_select %p38, %s39, %s40
    %p44 = pneg %p38
    %p45 = scmp.eq.s32.totalorder %s8, 3
    %p46 = por %p44, %p45
    %p47 = scmp.ne.s32.totalorder %s39, %s42
    %p48 = scmp.eq.s32.totalorder %s8, 0
    %p49 = por %p47, %p48
    %p50 = scmp.ne.s32.totalorder %s39, %s42
    %p51 = scmp.eq.s32.totalorder %s13, 3
    %p52 = por %p50, %p51
    %p53 = scmp.ne.s32.totalorder %s42, %s43
    %p54 = scmp.eq.s32.totalorder %s13, 0
    %p55 = por %p53, %p54
    %p56 = scmp.ne.s32.totalorder %s42, %s43
    %p57 = scmp.eq.s32.totalorder %s14, 3
    %p58 = por %p56, %p57
    %p60 = scmp.ne.s32.totalorder %s43, %s59
    %p61 = scmp.eq.s32.totalorder %s14, 0
    %p62 = por %p60, %p61
    %s63 = ssub.s32 %s8, %s15
    %p64 = scmp.eq.s32.totalorder %s63, 0
    %s66 = sadd.s32 %s65, 1
    %s67 = scalar_select %p64, %s65, %s66
    %p70 = pneg %p64
    %p71 = scmp.eq.s32.totalorder %s8, 3
    %p72 = por %p70, %p71
    %p73 = scmp.ne.s32.totalorder %s65, %s68
    %p74 = scmp.eq.s32.totalorder %s8, 0
    %p75 = por %p73, %p74
    %p76 = scmp.ne.s32.totalorder %s65, %s68
    %p77 = scmp.eq.s32.totalorder %s13, 3
    %p78 = por %p76, %p77
    %p79 = scmp.ne.s32.totalorder %s68, %s69
    %p80 = scmp.eq.s32.totalorder %s13, 0
    %p81 = por %p79, %p80
    %p82 = scmp.ne.s32.totalorder %s68, %s69
    %p83 = scmp.eq.s32.totalorder %s14, 3
    %p84 = por %p82, %p83
    %p86 = scmp.ne.s32.totalorder %s69, %s85
    %p87 = scmp.eq.s32.totalorder %s14, 0
    %p88 = por %p86, %p87
    %p89 = scmp.le.s32.totalorder 1, %s8
    %p90 = scmp.lt.s32.totalorder %s8, 5
    %p91 = pnand %p89, %p90
    %p92 = pneg %p91
    // Predicated region
    $region9: #{tpu_custom_call.1} parent=5 // pred_check
      _
    $region10: #{tpu_custom_call.1} parent=5 // pred_check_branch
      %94 = sbr.rel (%p91) target = $region12
    $region11: #{tpu_custom_call.1} parent=5 // pred_region
      %s95 = ssub.s32 %s8, 1
      // Predicated region
      $region13: #{tpu_custom_call.1} parent=11 // pred_check
        %p96 = pneg %p29
      $region14: #{tpu_custom_call.1} parent=11 // pred_check_branch
        %98 = sbr.rel (%p96) target = $region16
      $region15: #{tpu_custom_call.1} parent=11 // pred_region
        _
      $region16: #{tpu_custom_call.1} parent=11 // pred_fallthru
        _
    $region12: #{tpu_custom_call.1} parent=5 // pred_fallthru
      _
    %p99 = scmp.lt.s32.totalorder %s8, 4
    // Predicated region
    $region17: #{tpu_custom_call.1} parent=5 // pred_check
      %p100 = pneg %p99
    $region18: #{tpu_custom_call.1} parent=5 // pred_check_branch
      %102 = sbr.rel (%p100) target = $region20
    $region19: #{tpu_custom_call.1} parent=5 // pred_region
      // Predicated region
      $region21: #{tpu_custom_call.1} parent=19 // pred_check
        %p103 = pneg %p49
      $region22: #{tpu_custom_call.1} parent=19 // pred_check_branch
        %105 = sbr.rel (%p103) target = $region24
      $region23: #{tpu_custom_call.1} parent=19 // pred_region
        %s106 = smul.u32 4, %s8
        %p107 = scmp.lt.s32.totalorder %s106, 15
        %s108 = scalar_select %p107, %s106, 15
        %s109 = smul.addr %s108, 8
        %s110 = scalar_lea.vmem %s1, %s109
        %s111 = smul.u32 4, %s8
      $region24: #{tpu_custom_call.1} parent=19 // pred_fallthru
        _
    $region20: #{tpu_custom_call.1} parent=5 // pred_fallthru
      _
    %p112 = scmp.le.s32.totalorder 1, %s8
    %p113 = scmp.lt.s32.totalorder %s8, 5
    %p114 = pnand %p112, %p113
    %p115 = pneg %p114
    // Predicated region
    $region25: #{tpu_custom_call.1} parent=5 // pred_check
      _
    $region26: #{tpu_custom_call.1} parent=5 // pred_check_branch
      %117 = sbr.rel (%p114) target = $region28
    $region27: #{tpu_custom_call.1} parent=5 // pred_region
      %s118 = ssub.s32 %s8, 1
      %p119 = pneg %p29
      %p120 = pneg %p26
      %s121 = smul.u32 4, %s13
      %p122 = scmp.lt.s32.totalorder %s121, 15
      %s123 = scalar_select %p122, %s121, 15
      %s124 = smul.addr %s123, 8
      %s125 = scalar_lea.vmem %s1, %s124
      %p126 = pneg %p55
      %p127 = pneg %p52
      %p128 = pneg %p81
      %p129 = pneg %p78
      %s130 = smul.u32 4, %s13
      %p131 = scmp.lt.s32.totalorder %s130, 15
      %s132 = scalar_select %p131, %s130, 15
      %s133 = smul.addr %s132, 8
      %s134 = scalar_lea.vmem %s2, %s133
      %s135 = smul.u32 4, %s13
      %p136 = scmp.lt.s32.totalorder %s135, 15
      %s137 = scalar_select %p136, %s135, 15
      %s138 = smul.addr %s137, 8
      %s139 = scalar_lea.vmem %s1, %s138
      %s140 = smul.u32 4, %s13
      %s141 = smul.u32 4, %s13
      %p142 = scmp.lt.s32.totalorder %s141, 15
      %s143 = scalar_select %p142, %s141, 15
      %s144 = smul.addr %s143, 8
      %s145 = scalar_lea.vmem %s2, %s144
      %s146 = smul.u32 4, %s13
      %v148 = vld [vmem:[%s0] sm:$0xf]
      %v149 = vld [vmem:[%s0 + $0x4] sm:$0xf]
      %v150 = vld [vmem:[%s139] sm:$0xff]
      %v151 = vld [vmem:[%s139 + $0x8] sm:$0xff]
      %v152 = vld [vmem:[%s139 + $0x10] sm:$0xff]
      %v153 = vld [vmem:[%s139 + $0x18] sm:$0xff]
      %v154 = vpack.c.bf16 %v151, %v150
      %v155 = vpack.c.bf16 %v153, %v152
      %v156 = vunpack.c.l.bf16 %v154
      %v157 = vunpack.c.h.bf16 %v154
      %v158 = vunpack.c.l.bf16 %v155
      %v159 = vunpack.c.h.bf16 %v155
      %v160 = vsub.f32 %v150, %v156
      %v161 = vsub.f32 %v151, %v157
      %v162 = vsub.f32 %v152, %v158
      %v163 = vsub.f32 %v153, %v159
      %v164 = vpack.c.bf16 %v161, %v160
      %v165 = vpack.c.bf16 %v163, %v162
      %v166 = vunpack.c.l.bf16 %v164
      %v167 = vunpack.c.h.bf16 %v164
      %v168 = vunpack.c.l.bf16 %v165
      %v169 = vunpack.c.h.bf16 %v165
      %v170 = vsub.f32 %v160, %v166
      %v171 = vsub.f32 %v161, %v167
      %v172 = vsub.f32 %v162, %v168
      %v173 = vsub.f32 %v163, %v169
      %v174 = vpack.c.bf16 %v171, %v170
      %v175 = vpack.c.bf16 %v173, %v172
      %v178 = vunpack.c.l.b16 %v148
      %v179 = vunpack.c.l.b16 %v149
      %v180 = vpack.c.b16 %v179, %v178
      %vm182 = vcmask 130048
      %v184 = vsel %vm182, %v164, 0
      %v187 = vsel %vm182, %v165, 0
      %189 = vmatprep.subr.bf16.mxu0 0
      %190 = vmatpush1.bf16.msra.mxu0 %v180
      %191 = vmatprep.subr.bf16.mxu0 0
      %192 = vmatpush1.bf16.msra.mxu0 0
      %193 = vmatprep.subr.bf16.mxu0 0
      %194 = vmatpush1.bf16.msra.mxu0 0
      %195 = vmatprep.subr.bf16.mxu0 0
      %196 = vmatpush1.bf16.msra.mxu0 0
      %197 = vmatprep.subr.bf16.mxu0 0
      %198 = vmatpush1.bf16.msra.mxu0 0
      %199 = vmatprep.subr.bf16.mxu0 0
      %200 = vmatpush1.bf16.msra.mxu0 0
      %201 = vmatprep.subr.bf16.mxu0 0
      %202 = vmatpush1.bf16.msra.mxu0 0
      %203 = vmatprep.subr.bf16.mxu0 0
      %204 = vmatpush1.bf16.msra.mxu0 0
      %205 = vmatprep.subr.bf16.mxu0 0
      %206 = vmatpush1.bf16.msra.mxu0 0
      %207 = vmatprep.subr.bf16.mxu0 0
      %208 = vmatpush1.bf16.msra.mxu0 0
      %209 = vmatprep.subr.bf16.mxu0 0
      %210 = vmatpush1.bf16.msra.mxu0 0
      %211 = vmatprep.subr.bf16.mxu0 0
      %212 = vmatpush1.bf16.msra.mxu0 0
      %213 = vmatprep.subr.bf16.mxu0 0
      %214 = vmatpush1.bf16.msra.mxu0 0
      %215 = vmatprep.subr.bf16.mxu0 0
      %216 = vmatpush1.bf16.msra.mxu0 0
      %217 = vmatprep.subr.bf16.mxu0 0
      %218 = vmatpush1.bf16.msra.mxu0 0
      %219 = vmatprep.subr.bf16.mxu0 0
      %220 = vmatpush1.bf16.msra.mxu0 0
      %221 = vmatprep.mubr.bf16.mxu0 0
      %222 = vmatmul.mubr.bf16.gmra.mrb[0].mxu0 %v184
      %v223 = vpop.f32.mrb[0].mxu0
      %v224 = vadd.f32 0.0, %v223
      %v225 = vpop.f32.mrb[0].mxu0
      %v226 = vpop.f32.mrb[0].mxu0
      %v227 = vadd.f32 0.0, %v226
      %v228 = vpop.f32.mrb[0].mxu0
      %229 = vmatprep.mubr.bf16.mxu0 0
      %230 = vmatmul.mubr.bf16.gmra.mrb[0].mxu0 %v187
      %v231 = vpop.f32.mrb[0].mxu0
      %v232 = vadd.f32 0.0, %v231
      %v233 = vpop.f32.mrb[0].mxu0
      %v234 = vpop.f32.mrb[0].mxu0
      %v235 = vadd.f32 0.0, %v234
      %v236 = vpop.f32.mrb[0].mxu0
      %237 = vdwg.mxu0
      %v239 = vsel %vm182, %v154, 0
      %v242 = vsel %vm182, %v155, 0
      %244 = vmatprep.subr.bf16.mxu0 0
      %245 = vmatpush1.bf16.msra.mxu0 %v180
      %246 = vmatprep.subr.bf16.mxu0 0
      %247 = vmatpush1.bf16.msra.mxu0 0
      %248 = vmatprep.subr.bf16.mxu0 0
      %249 = vmatpush1.bf16.msra.mxu0 0
      %250 = vmatprep.subr.bf16.mxu0 0
      %251 = vmatpush1.bf16.msra.mxu0 0
      %252 = vmatprep.subr.bf16.mxu0 0
      %253 = vmatpush1.bf16.msra.mxu0 0
      %254 = vmatprep.subr.bf16.mxu0 0
      %255 = vmatpush1.bf16.msra.mxu0 0
      %256 = vmatprep.subr.bf16.mxu0 0
      %257 = vmatpush1.bf16.msra.mxu0 0
      %258 = vmatprep.subr.bf16.mxu0 0
      %259 = vmatpush1.bf16.msra.mxu0 0
      %260 = vmatprep.subr.bf16.mxu0 0
      %261 = vmatpush1.bf16.msra.mxu0 0
      %262 = vmatprep.subr.bf16.mxu0 0
      %263 = vmatpush1.bf16.msra.mxu0 0
      %264 = vmatprep.subr.bf16.mxu0 0
      %265 = vmatpush1.bf16.msra.mxu0 0
      %266 = vmatprep.subr.bf16.mxu0 0
      %267 = vmatpush1.bf16.msra.mxu0 0
      %268 = vmatprep.subr.bf16.mxu0 0
      %269 = vmatpush1.bf16.msra.mxu0 0
      %270 = vmatprep.subr.bf16.mxu0 0
      %271 = vmatpush1.bf16.msra.mxu0 0
      %272 = vmatprep.subr.bf16.mxu0 0
      %273 = vmatpush1.bf16.msra.mxu0 0
      %274 = vmatprep.subr.bf16.mxu0 0
      %275 = vmatpush1.bf16.msra.mxu0 0
      %276 = vmatprep.mubr.bf16.mxu0 0
      %277 = vmatmul.mubr.bf16.gmra.mrb[0].mxu0 %v239
      %v278 = vpop.f32.mrb[0].mxu0
      %v279 = vadd.f32 %v224, %v278
      %v280 = vpop.f32.mrb[0].mxu0
      %v281 = vpop.f32.mrb[0].mxu0
      %v282 = vadd.f32 %v227, %v281
      %v283 = vpop.f32.mrb[0].mxu0
      %284 = vmatprep.mubr.bf16.mxu0 0
      %285 = vmatmul.mubr.bf16.gmra.mrb[0].mxu0 %v242
      %v286 = vpop.f32.mrb[0].mxu0
      %v287 = vadd.f32 %v232, %v286
      %v288 = vpop.f32.mrb[0].mxu0
      %v289 = vpop.f32.mrb[0].mxu0
      %v290 = vadd.f32 %v235, %v289
      %v291 = vpop.f32.mrb[0].mxu0
      %292 = vdwg.mxu0
      %v294 = vsel %vm182, %v174, 0
      %v297 = vsel %vm182, %v175, 0
      %299 = vmatprep.subr.bf16.mxu0 0
      %300 = vmatpush1.bf16.msra.mxu0 %v180
      %301 = vmatprep.subr.bf16.mxu0 0
      %302 = vmatpush1.bf16.msra.mxu0 0
      %303 = vmatprep.subr.bf16.mxu0 0
      %304 = vmatpush1.bf16.msra.mxu0 0
      %305 = vmatprep.subr.bf16.mxu0 0
      %306 = vmatpush1.bf16.msra.mxu0 0
      %307 = vmatprep.subr.bf16.mxu0 0
      %308 = vmatpush1.bf16.msra.mxu0 0
      %309 = vmatprep.subr.bf16.mxu0 0
      %310 = vmatpush1.bf16.msra.mxu0 0
      %311 = vmatprep.subr.bf16.mxu0 0
      %312 = vmatpush1.bf16.msra.mxu0 0
      %313 = vmatprep.subr.bf16.mxu0 0
      %314 = vmatpush1.bf16.msra.mxu0 0
      %315 = vmatprep.subr.bf16.mxu0 0
      %316 = vmatpush1.bf16.msra.mxu0 0
      %317 = vmatprep.subr.bf16.mxu0 0
      %318 = vmatpush1.bf16.msra.mxu0 0
      %319 = vmatprep.subr.bf16.mxu0 0
      %320 = vmatpush1.bf16.msra.mxu0 0
      %321 = vmatprep.subr.bf16.mxu0 0
      %322 = vmatpush1.bf16.msra.mxu0 0
      %323 = vmatprep.subr.bf16.mxu0 0
      %324 = vmatpush1.bf16.msra.mxu0 0
      %325 = vmatprep.subr.bf16.mxu0 0
      %326 = vmatpush1.bf16.msra.mxu0 0
      %327 = vmatprep.subr.bf16.mxu0 0
      %328 = vmatpush1.bf16.msra.mxu0 0
      %329 = vmatprep.subr.bf16.mxu0 0
      %330 = vmatpush1.bf16.msra.mxu0 0
      %331 = vmatprep.mubr.bf16.mxu0 0
      %332 = vmatmul.mubr.bf16.gmra.mrb[0].mxu0 %v294
      %v333 = vpop.f32.mrb[0].mxu0
      %v334 = vadd.f32 0.0, %v333
      %v335 = vpop.f32.mrb[0].mxu0
      %v336 = vpop.f32.mrb[0].mxu0
      %v337 = vadd.f32 0.0, %v336
      %v338 = vpop.f32.mrb[0].mxu0
      %339 = vmatprep.mubr.bf16.mxu0 0
      %340 = vmatmul.mubr.bf16.gmra.mrb[0].mxu0 %v297
      %v341 = vpop.f32.mrb[0].mxu0
      %v342 = vadd.f32 0.0, %v341
      %v343 = vpop.f32.mrb[0].mxu0
      %v344 = vpop.f32.mrb[0].mxu0
      %v345 = vadd.f32 0.0, %v344
      %v346 = vpop.f32.mrb[0].mxu0
      %347 = vdwg.mxu0
      %v348 = vadd.f32 %v279, %v334
      %v349 = vadd.f32 %v282, %v337
      %v350 = vadd.f32 %v287, %v342
      %v351 = vadd.f32 %v290, %v345
      %vm352 = vcmask 261120
      %353 = vst.msk [vmem:[%s145] sm:$0xff] %vm352, %v348
      %354 = vst.msk [vmem:[%s145 + $0x8] sm:$0xff] %vm352, %v349
      %355 = vst.msk [vmem:[%s145 + $0x10] sm:$0xff] %vm352, %v350
      %356 = vst.msk [vmem:[%s145 + $0x18] sm:$0xff] %vm352, %v351
      %361 = vrot.lane.b32.xlu0 %v348, 32
      %v362 = vpop.permute.xlu0 %361
      %363 = vrot.lane.b32.xlu0 %v349, 32
      %v364 = vpop.permute.xlu0 %363
      %365 = vrot.lane.b32.xlu0 %v350, 32
      %v366 = vpop.permute.xlu0 %365
      %367 = vrot.lane.b32.xlu0 %v351, 32
      %v368 = vpop.permute.xlu0 %367
      %vm373 = vcmask 523520
      %374 = vst.msk [vmem:[%s145] sm:$0xff] %vm373, %v362
      %375 = vst.msk [vmem:[%s145 + $0x8] sm:$0xff] %vm373, %v364
      %376 = vst.msk [vmem:[%s145 + $0x10] sm:$0xff] %vm373, %v366
      %377 = vst.msk [vmem:[%s145 + $0x18] sm:$0xff] %vm373, %v368
      %s378 = smul.u32 4, %s13
      %p379 = scmp.lt.s32.totalorder %s378, 15
      %s380 = scalar_select %p379, %s378, 15
      %s381 = smul.addr %s380, 8
      %s382 = scalar_lea.vmem %s2, %s381
      // Predicated region
      $region29: #{tpu_custom_call.1} parent=27 // pred_check
        %p383 = pneg %p78
      $region30: #{tpu_custom_call.1} parent=27 // pred_check_branch
        %385 = sbr.rel (%p383) target = $region32
      $region31: #{tpu_custom_call.1} parent=27 // pred_region
        %s386 = smul.u32 4, %s13
      $region32: #{tpu_custom_call.1} parent=27 // pred_fallthru
        _
    $region28: #{tpu_custom_call.1} parent=5 // pred_fallthru
      _
    %p387 = scmp.le.s32.totalorder 2, %s8
    // Predicated region
    $region33: #{tpu_custom_call.1} parent=5 // pred_check
      %p388 = pneg %p387
    $region34: #{tpu_custom_call.1} parent=5 // pred_check_branch
      %390 = sbr.rel (%p388) target = $region36
    $region35: #{tpu_custom_call.1} parent=5 // pred_region
      %s391 = ssub.s32 %s8, 2
      // Predicated region
      $region37: #{tpu_custom_call.1} parent=35 // pred_check
        %p392 = pneg %p84
      $region38: #{tpu_custom_call.1} parent=35 // pred_check_branch
        %394 = sbr.rel (%p392) target = $region40
      $region39: #{tpu_custom_call.1} parent=35 // pred_region
        %s395 = smul.u32 4, %s14
        %p396 = scmp.lt.s32.totalorder %s395, 15
        %s397 = scalar_select %p396, %s395, 15
        %s398 = smul.addr %s397, 8
        %s399 = scalar_lea.vmem %s2, %s398
      $region40: #{tpu_custom_call.1} parent=35 // pred_fallthru
        _
    $region36: #{tpu_custom_call.1} parent=5 // pred_fallthru
      _
  $region6: #{tpu_custom_call.1} parent=0 // loop_footer
    %s12 = sadd.s32 1, %s8
  $region7: #{tpu_custom_call.1} parent=0 // loop_footer_branch
    %7 = sbr.rel target = $region3
  $region8: #{tpu_custom_call.1} parent=0 // loop_exit
    _

</llo_original>
